<compile_context>
chip_gen: v5e
topology: v5e:2x2
jax: 0.10.0
libtpu: 0.0.40
codegen_flags: <defaults>
</compile_context>

<pallas_src>
import functools

import jax
import jax.numpy as jnp
from jax.experimental import pallas as pl
from jax.experimental.pallas import tpu as pltpu

_NEG_BIG = -1e30  # "minus infinity" that stays finite under arithmetic


def _round_up(a, m):
    return (a + m - 1) // m * m


def _pnca_kernel(x_ref, pt_ref, lab_ref, out_ref, m_ref, l_ref, num_ref,
                 *, alpha, c_actual, c_padded):
    c = pl.program_id(1)
    n_c = pl.num_programs(1)
    b_tile = x_ref.shape[0]
    c_tile = pt_ref.shape[1]

    # ---- init accumulators at the first C step of each B-tile ----
    @pl.when(c == 0)
    def _init():
        m_ref[...] = jnp.full(m_ref.shape, _NEG_BIG, m_ref.dtype)
        l_ref[...] = jnp.zeros(l_ref.shape, l_ref.dtype)
        num_ref[...] = jnp.zeros(num_ref.shape, num_ref.dtype)

    # ---- logits = 2*alpha * (xn @ pn^T); inputs are pre-normalized (length 3) and pre-cast
    #      in the wrapper; proxies arrive as (D, c_tile) so this is a plain NN matmul (MXU,
    #      bf16 operands, f32 accumulation) with no in-kernel transpose. ----
    dots = jax.lax.dot_general(
        x_ref[...], pt_ref[...], (((1,), (0,)), ((), ())),
        preferred_element_type=jnp.float32)                     # (b_tile, c_tile) f32
    logits = (2.0 * alpha) * dots

    iota = jax.lax.broadcasted_iota(jnp.int32, (b_tile, c_tile), 1)
    base = c * c_tile                                           # scalar shift, no per-elem add
    if c_padded != c_actual:                                    # static: mask padded proxy cols
        logits = jnp.where(iota < (c_actual - base), logits, _NEG_BIG)

    # ---- online logsumexp over the C axis ----
    m_prev = m_ref[...]
    m_new = jnp.maximum(m_prev, jnp.max(logits, axis=1, keepdims=True))
    # NOTE: exp kept in f32 for v5e compatibility / accuracy; bf16 exp would be a v6e/v7x-only
    # micro-opt if the EUP ever binds.
    probs = jnp.exp(logits - m_new)
    l_ref[...] = jnp.exp(m_prev - m_new) * l_ref[...] + jnp.sum(probs, axis=1, keepdims=True)
    m_ref[...] = m_new

    # ---- gather the label-column logit via one-hot compare (TPU-friendly gather) ----
    onehot = iota == (lab_ref[...] - base)                      # (b_tile, c_tile) bool
    num_ref[...] += jnp.sum(jnp.where(onehot, logits, 0.0), axis=1, keepdims=True)

    # ---- finalize at the last C step: per-row log-softmax at the label column ----
    @pl.when(c == n_c - 1)
    def _finalize():
        out_ref[...] = num_ref[...] - (m_ref[...] + jnp.log(l_ref[...]))


def pnca_loss_pallas(image_embed, proxies, labels, *, alpha=1.0, mrg=1.0,
                     use_bf16_matmul=True, vmem_budget_bytes=40 << 20):
    """Proxy-NCA loss. `mrg` cancels inside the per-row log-softmax; accepted for API parity.

    use_bf16_matmul=False keeps f32 MXU operands (recommended for very large alpha, where
    bf16 dot rounding is amplified by the 2*alpha logit scale).
    """
    del mrg
    B, D = image_embed.shape
    C, D2 = proxies.shape
    assert D2 == D

    mm_dtype = jnp.bfloat16 if use_bf16_matmul else jnp.float32
    mm_bytes = 2 if use_bf16_matmul else 4

    # ---- pre-normalize to length 3 and pre-cast ONCE in the wrapper ----
    x = image_embed.astype(jnp.float32)
    p = proxies.astype(jnp.float32)
    xn = (3.0 * x / jnp.maximum(jnp.linalg.norm(x, axis=1, keepdims=True), 1e-12)).astype(mm_dtype)
    pn = (3.0 * p / jnp.maximum(jnp.linalg.norm(p, axis=1, keepdims=True), 1e-12)).astype(mm_dtype)
    lab = labels.reshape(B, 1).astype(jnp.int32)

    # ---- tile selection ----
    def est(b_t, c_t):
        lane = 128
        e = 2 * b_t * D * mm_bytes          # x blocks (double-buffered)
        e += 2 * D * c_t * mm_bytes         # proxy^T blocks (double-buffered)
        e += 2 * b_t * lane * 4             # labels blocks (lane-padded int32)
        e += 2 * b_t * lane * 4             # per-row output blocks (lane-padded f32)
        e += 3 * b_t * lane * 4             # m / l / num scratch
        e += 4 * b_t * c_t * 4              # logits / probs / mask temporaries (f32)
        return e

    c_pad128 = _round_up(C, 128)

    # b_tile: large enough to amortize proxy re-streaming, but capped so the "parallel" B axis
    # has >= 2 programs (both v7x TensorCores busy) when the batch is big enough to split.
    b_cap = _round_up(-(-B // 2), 8) if B >= 16 else _round_up(B, 8)
    b_tile = min(256, b_cap)

    if est(b_tile, c_pad128) <= vmem_budget_bytes:
        # Resident-proxy path: single C step, proxies DMA'd exactly once for the whole kernel.
        c_tile = c_pad128
    else:
        # Streamed-C path: lane-dense 512-wide proxy tiles, bigger B tiles to cut re-streaming.
        c_tile = min(512, c_pad128)
        b_tile = min(512, b_cap)
        while est(b_tile, c_tile) > vmem_budget_bytes and b_tile > 8:
            b_tile = max(8, b_tile // 2)
        while est(b_tile, c_tile) > vmem_budget_bytes and c_tile > 128:
            c_tile = max(128, c_tile // 2)

    b_pad = _round_up(B, b_tile)
    c_pad = _round_up(C, c_tile)

    if b_pad != B:
        xn = jnp.pad(xn, ((0, b_pad - B), (0, 0)))
        lab = jnp.pad(lab, ((0, b_pad - B), (0, 0)))
    if c_pad != C:
        pn = jnp.pad(pn, ((0, c_pad - C), (0, 0)))
    pnT = pn.T                                                  # (D, c_pad): one XLA transpose outside

    n_b = b_pad // b_tile
    n_c = c_pad // c_tile

    kernel = functools.partial(_pnca_kernel, alpha=float(alpha),
                               c_actual=C, c_padded=c_pad)

    # Explicit VMEM limit: sized from the estimate with headroom, safe for v7x's 64 MiB
    # physical and above v5e's 16 MiB scoped default when tiles are enlarged.
    vmem_limit = int(min(max(est(b_tile, c_tile) * 5 // 4, 16 << 20), 56 << 20))

    per_row = pl.pallas_call(
        kernel,
        out_shape=jax.ShapeDtypeStruct((b_pad, 1), jnp.float32),
        grid_spec=pltpu.PrefetchScalarGridSpec(
            num_scalar_prefetch=0,
            grid=(n_b, n_c),
            in_specs=[
                pl.BlockSpec((b_tile, D), lambda b, c: (b, 0)),   # xn: resident per B-tile
                pl.BlockSpec((D, c_tile), lambda b, c: (0, c)),   # pn^T: resident or streamed over C
                pl.BlockSpec((b_tile, 1), lambda b, c: (b, 0)),   # labels per B-tile
            ],
            out_specs=pl.BlockSpec((b_tile, 1), lambda b, c: (b, 0)),
            scratch_shapes=[
                pltpu.VMEM((b_tile, 1), jnp.float32),  # running max
                pltpu.VMEM((b_tile, 1), jnp.float32),  # running sum of exp
                pltpu.VMEM((b_tile, 1), jnp.float32),  # label-column logit
            ]),
        compiler_params=pltpu.CompilerParams(
            dimension_semantics=("parallel", "arbitrary"),
            vmem_limit_bytes=vmem_limit),
    )(xn, pnT, lab)

    # TODO(synk): degenerate all-zero embedding/proxy rows follow the 1e-12 eps guard (like
    # torch F.normalize) but the dropped clamp(d2,0) / cdist rounding may differ at ~ulp level.
    return jnp.sum(per_row[:B, 0])


def pnca_loss_ref(image_embed, proxies, labels, *, alpha=1.0, mrg=1.0):
    """Pure-JAX mirror of the PyTorch forward (linear-domain num/denom)."""
    xn = 3.0 * image_embed / jnp.maximum(
        jnp.linalg.norm(image_embed, axis=1, keepdims=True), 1e-12)
    pn = 3.0 * proxies / jnp.maximum(
        jnp.linalg.norm(proxies, axis=1, keepdims=True), 1e-12)
    d2 = (jnp.sum(xn * xn, 1, keepdims=True)
          + jnp.sum(pn * pn, 1, keepdims=True).T
          - 2.0 * jnp.matmul(xn, pn.T, precision=jax.lax.Precision.HIGHEST))
    d2 = jnp.maximum(d2, 0.0)
    e = jnp.exp(-alpha * (d2 - mrg))
    num = e[jnp.arange(e.shape[0]), labels]
    den = e.sum(axis=1)
    return jnp.sum(jnp.log(num / den))


if __name__ == "__main__":
    B, D, C = 8, 32, 16          # batch, embed_size, n_classes
    key = jax.random.PRNGKey(0)
    kx, kp, kl = jax.random.split(key, 3)

    image_embed = jax.random.normal(kx, (B, D), dtype=jnp.float32)
    proxies = jax.random.normal(kp, (C, D), dtype=jnp.float32)   # nn.Parameter randn init
    labels = jax.random.randint(kl, (B,), 0, C, dtype=jnp.int32)

    ref = pnca_loss_ref(image_embed, proxies, labels, alpha=1.0, mrg=1.0)

    # f32-operand path (exact structural check).
    loss_f32 = pnca_loss_pallas(image_embed, proxies, labels, alpha=1.0, mrg=1.0,
                                use_bf16_matmul=False)
    jax.block_until_ready(loss_f32)
    assert jnp.allclose(loss_f32, ref, rtol=5e-3, atol=5e-3), (loss_f32, ref)

    # Default fast path: bf16 MXU operands, f32 accumulation.
    loss = pnca_loss_pallas(image_embed, proxies, labels, alpha=1.0, mrg=1.0)
    jax.block_until_ready(loss)
    assert jnp.allclose(loss, ref, rtol=2e-2, atol=2e-2), (loss, ref)

    # Exercise the streamed-C (multi C-tile) code path with a tiny VMEM budget.
    loss_tiled = pnca_loss_pallas(image_embed, proxies, labels, alpha=1.0, mrg=1.0,
                                  use_bf16_matmul=False, vmem_budget_bytes=1)
    jax.block_until_ready(loss_tiled)
    assert jnp.allclose(loss_tiled, ref, rtol=5e-3, atol=5e-3), (loss_tiled, ref)

    print("KERNEL_OK")
</pallas_src>

<mosaic_0001>
module attributes {stable_mosaic.version = 11 : i64} {
  func.func @_pnca_kernel(%arg0: i32, %arg1: i32, %arg2: memref<8x32xf32, #tpu.memory_space<vmem>>, %arg3: memref<32x128xf32, #tpu.memory_space<vmem>>, %arg4: memref<8x1xi32, #tpu.memory_space<vmem>>, %arg5: memref<8x1xf32, #tpu.memory_space<vmem>>, %arg6: memref<8x1xf32, #tpu.memory_space<vmem>>, %arg7: memref<8x1xf32, #tpu.memory_space<vmem>>, %arg8: memref<8x1xf32, #tpu.memory_space<vmem>>) attributes {dimension_semantics = [#tpu.dimension_semantics<parallel>, #tpu.dimension_semantics<arbitrary>], iteration_bounds = array<i64: 1, 1>, scalar_prefetch = 0 : i64, scratch_operands = 3 : i64, tpu.core_type = #tpu.core_type<tc>, window_params = [{transform_indices = @transform_0, window_bounds = array<i64: 8, 32>}, {transform_indices = @transform_1, window_bounds = array<i64: 32, 128>}, {transform_indices = @transform_2, window_bounds = array<i64: 8, 1>}, {transform_indices = @transform_3, window_bounds = array<i64: 8, 1>}]} {
    %c0_i32 = arith.constant 0 : i32
    %0 = arith.cmpi eq, %arg1, %c0_i32 : i32
    %1 = arith.extui %0 : i1 to i32
    %c0_i32_0 = arith.constant 0 : i32
    %2 = arith.cmpi ne, %1, %c0_i32_0 : i32
    scf.if %2 {
      %cst_26 = arith.constant -1.000000e+30 : f32
      %46 = vector.broadcast %cst_26 : f32 to vector<8x1xf32>
      %c0_27 = arith.constant 0 : index
      %c0_28 = arith.constant 0 : index
      %47 = vector.load %arg6[%c0_27, %c0_28] : memref<8x1xf32, #tpu.memory_space<vmem>>, vector<8x1xf32>
      tpu.vector_store %arg6[%c0_27, %c0_28], %46 {strides = array<i32>} : memref<8x1xf32, #tpu.memory_space<vmem>>, vector<8x1xf32>,
      %cst_29 = arith.constant 0.000000e+00 : f32
      %48 = vector.broadcast %cst_29 : f32 to vector<8x1xf32>
      %c0_30 = arith.constant 0 : index
      %c0_31 = arith.constant 0 : index
      %49 = vector.load %arg7[%c0_30, %c0_31] : memref<8x1xf32, #tpu.memory_space<vmem>>, vector<8x1xf32>
      tpu.vector_store %arg7[%c0_30, %c0_31], %48 {strides = array<i32>} : memref<8x1xf32, #tpu.memory_space<vmem>>, vector<8x1xf32>,
      %cst_32 = arith.constant 0.000000e+00 : f32
      %50 = vector.broadcast %cst_32 : f32 to vector<8x1xf32>
      %c0_33 = arith.constant 0 : index
      %c0_34 = arith.constant 0 : index
      %51 = vector.load %arg8[%c0_33, %c0_34] : memref<8x1xf32, #tpu.memory_space<vmem>>, vector<8x1xf32>
      tpu.vector_store %arg8[%c0_33, %c0_34], %50 {strides = array<i32>} : memref<8x1xf32, #tpu.memory_space<vmem>>, vector<8x1xf32>,
    } else {
    }
    %c0 = arith.constant 0 : index
    %c0_1 = arith.constant 0 : index
    %3 = vector.load %arg2[%c0, %c0_1] : memref<8x32xf32, #tpu.memory_space<vmem>>, vector<8x32xf32>
    %c0_2 = arith.constant 0 : index
    %c0_3 = arith.constant 0 : index
    %4 = vector.load %arg3[%c0_2, %c0_3] : memref<32x128xf32, #tpu.memory_space<vmem>>, vector<32x128xf32>
    %cst = arith.constant dense<0.000000e+00> : vector<8x128xf32>
    %5 = tpu.matmul %3, %4, %cst {dimension_numbers = #tpu.dot_dimension_numbers<[1], [0], [0], [1], [0, 0, 1, 1], [], []>} : vector<8x32xf32>, vector<32x128xf32>, vector<8x128xf32> -> vector<8x128xf32>
    %cst_4 = arith.constant 2.000000e+00 : f32
    %6 = vector.broadcast %cst_4 : f32 to vector<8x128xf32>
    %7 = arith.mulf %6, %5 : vector<8x128xf32>
    %8 = tpu.iota {dimensions = array<i32: 1>} : vector<8x128xi32>
    %c128_i32 = arith.constant 128 : i32
    %9 = arith.muli %arg1, %c128_i32 : i32
    %c16_i32 = arith.constant 16 : i32
    %10 = arith.subi %c16_i32, %9 : i32
    %11 = vector.broadcast %10 : i32 to vector<8x128xi32>
    %12 = arith.cmpi slt, %8, %11 : vector<8x128xi32>
    %cst_5 = arith.constant -1.000000e+30 : f32
    %13 = vector.broadcast %cst_5 : f32 to vector<8x128xf32>
    %14 = arith.select %12, %7, %13 : vector<8x128xi1>, vector<8x128xf32>
    %c0_6 = arith.constant 0 : index
    %c0_7 = arith.constant 0 : index
    %15 = vector.load %arg6[%c0_6, %c0_7] : memref<8x1xf32, #tpu.memory_space<vmem>>, vector<8x1xf32>
    %cst_8 = arith.constant dense<0xFF800000> : vector<8xf32>
    %16 = vector.multi_reduction <maximumf>, %14, %cst_8 [1] : vector<8x128xf32> to vector<8xf32>
    %17 = vector.shape_cast %16 : vector<8xf32> to vector<8x1xf32>
    %18 = arith.maximumf %15, %17 : vector<8x1xf32>
    %19 = vector.broadcast %18 : vector<8x1xf32> to vector<8x128xf32>
    %20 = arith.subf %14, %19 : vector<8x128xf32>
    %21 = math.exp %20 : vector<8x128xf32>
    %22 = arith.subf %15, %18 : vector<8x1xf32>
    %23 = math.exp %22 : vector<8x1xf32>
    %c0_9 = arith.constant 0 : index
    %c0_10 = arith.constant 0 : index
    %24 = vector.load %arg7[%c0_9, %c0_10] : memref<8x1xf32, #tpu.memory_space<vmem>>, vector<8x1xf32>
    %25 = arith.mulf %23, %24 : vector<8x1xf32>
    %cst_11 = arith.constant dense<0.000000e+00> : vector<8xf32>
    %26 = vector.multi_reduction <add>, %21, %cst_11 [1] : vector<8x128xf32> to vector<8xf32>
    %27 = vector.shape_cast %26 : vector<8xf32> to vector<8x1xf32>
    %28 = arith.addf %25, %27 : vector<8x1xf32>
    %c0_12 = arith.constant 0 : index
    %c0_13 = arith.constant 0 : index
    %29 = vector.load %arg7[%c0_12, %c0_13] : memref<8x1xf32, #tpu.memory_space<vmem>>, vector<8x1xf32>
    tpu.vector_store %arg7[%c0_12, %c0_13], %28 {strides = array<i32>} : memref<8x1xf32, #tpu.memory_space<vmem>>, vector<8x1xf32>,
    %c0_14 = arith.constant 0 : index
    %c0_15 = arith.constant 0 : index
    %30 = vector.load %arg6[%c0_14, %c0_15] : memref<8x1xf32, #tpu.memory_space<vmem>>, vector<8x1xf32>
    tpu.vector_store %arg6[%c0_14, %c0_15], %18 {strides = array<i32>} : memref<8x1xf32, #tpu.memory_space<vmem>>, vector<8x1xf32>,
    %c0_16 = arith.constant 0 : index
    %c0_17 = arith.constant 0 : index
    %31 = vector.load %arg4[%c0_16, %c0_17] : memref<8x1xi32, #tpu.memory_space<vmem>>, vector<8x1xi32>
    %32 = vector.broadcast %9 : i32 to vector<8x1xi32>
    %33 = arith.subi %31, %32 : vector<8x1xi32>
    %34 = vector.broadcast %33 : vector<8x1xi32> to vector<8x128xi32>
    %35 = arith.cmpi eq, %8, %34 : vector<8x128xi32>
    %c0_18 = arith.constant 0 : index
    %c0_19 = arith.constant 0 : index
    %36 = vector.load %arg8[%c0_18, %c0_19] : memref<8x1xf32, #tpu.memory_space<vmem>>, vector<8x1xf32>
    %cst_20 = arith.constant 0.000000e+00 : f32
    %37 = vector.broadcast %cst_20 : f32 to vector<8x128xf32>
    %38 = arith.select %35, %14, %37 : vector<8x128xi1>, vector<8x128xf32>
    %cst_21 = arith.constant dense<0.000000e+00> : vector<8xf32>
    %39 = vector.multi_reduction <add>, %38, %cst_21 [1] : vector<8x128xf32> to vector<8xf32>
    %40 = vector.shape_cast %39 : vector<8xf32> to vector<8x1xf32>
    %41 = arith.addf %36, %40 : vector<8x1xf32>
    %c0_22 = arith.constant 0 : index
    %c0_23 = arith.constant 0 : index
    %42 = vector.load %arg8[%c0_22, %c0_23] : memref<8x1xf32, #tpu.memory_space<vmem>>, vector<8x1xf32>
    tpu.vector_store %arg8[%c0_22, %c0_23], %41 {strides = array<i32>} : memref<8x1xf32, #tpu.memory_space<vmem>>, vector<8x1xf32>,
    %c0_i32_24 = arith.constant 0 : i32
    %43 = arith.cmpi eq, %arg1, %c0_i32_24 : i32
    %44 = arith.extui %43 : i1 to i32
    %c0_i32_25 = arith.constant 0 : i32
    %45 = arith.cmpi ne, %44, %c0_i32_25 : i32
    scf.if %45 {
      %c0_26 = arith.constant 0 : index
      %c0_27 = arith.constant 0 : index
      %46 = vector.load %arg8[%c0_26, %c0_27] : memref<8x1xf32, #tpu.memory_space<vmem>>, vector<8x1xf32>
      %c0_28 = arith.constant 0 : index
      %c0_29 = arith.constant 0 : index
      %47 = vector.load %arg6[%c0_28, %c0_29] : memref<8x1xf32, #tpu.memory_space<vmem>>, vector<8x1xf32>
      %c0_30 = arith.constant 0 : index
      %c0_31 = arith.constant 0 : index
      %48 = vector.load %arg7[%c0_30, %c0_31] : memref<8x1xf32, #tpu.memory_space<vmem>>, vector<8x1xf32>
      %49 = math.log %48 : vector<8x1xf32>
      %50 = arith.addf %47, %49 : vector<8x1xf32>
      %51 = arith.subf %46, %50 : vector<8x1xf32>
      %c0_32 = arith.constant 0 : index
      %c0_33 = arith.constant 0 : index
      %52 = vector.load %arg5[%c0_32, %c0_33] : memref<8x1xf32, #tpu.memory_space<vmem>>, vector<8x1xf32>
      tpu.vector_store %arg5[%c0_32, %c0_33], %51 {strides = array<i32>} : memref<8x1xf32, #tpu.memory_space<vmem>>, vector<8x1xf32>,
    } else {
    }
    return
  }
  func.func @transform_0(%arg0: i32, %arg1: i32) -> (i32, i32) {
    %c0_i32 = arith.constant 0 : i32
    %c0_i32_0 = arith.constant 0 : i32
    return %arg0, %c0_i32 : i32, i32
  }
  func.func @transform_1(%arg0: i32, %arg1: i32) -> (i32, i32) {
    %c0_i32 = arith.constant 0 : i32
    %c0_i32_0 = arith.constant 0 : i32
    return %c0_i32, %arg1 : i32, i32
  }
  func.func @transform_2(%arg0: i32, %arg1: i32) -> (i32, i32) {
    %c0_i32 = arith.constant 0 : i32
    %c0_i32_0 = arith.constant 0 : i32
    return %arg0, %c0_i32 : i32, i32
  }
  func.func @transform_3(%arg0: i32, %arg1: i32) -> (i32, i32) {
    %c0_i32 = arith.constant 0 : i32
    %c0_i32_0 = arith.constant 0 : i32
    return %arg0, %c0_i32 : i32, i32
  }
}

</mosaic_0001>

<llo_original>
// kernel: tpu_custom_call.1
$region0: #{tpu_custom_call.1}
  #allocation0 [shape = 'u32[]', space=smem, size = 0x4, offset = 0x4, fixed_abs, tag = 'smem constant byte address 0x4 - core index']
  #allocation1 [shape = 'u32[72,128]{1,0:T(1,128)}', space=vmem, size = 0x9000, scoped, tag = 'internal scratch']
  #allocation2 [shape = 'f32[8,1]{1,0:T(8,128)}', space=vmem, size = 0x1000, scoped, tag = 'scratch operand']
  #allocation3 [shape = 'f32[8,1]{1,0:T(8,128)}', space=vmem, size = 0x1000, scoped, tag = 'scratch operand']
  #allocation4 [shape = 'f32[8,1]{1,0:T(8,128)}', space=vmem, size = 0x1000, scoped, tag = 'scratch operand']
  %s0 = inlined_call_operand.vmem [shape: f32[8,32], index: 0, kind: input, shape index: {}]
  %s1 = inlined_call_operand.hbm [shape: f32[32,128], index: 1, kind: input, shape index: {}]
  %s2 = inlined_call_operand.vmem [shape: s32[8,1], index: 2, kind: input, shape index: {}]
  %s3 = inlined_call_operand.vmem [shape: f32[8,1], index: 3, kind: output, shape index: {}]
  %s4 = sld [smem:[#allocation0]]
  $region34: #{tpu_custom_call.1} parent=0
    _
  %s6 = ssub.s32 1, %s4
  %s7 = scalar_select 0, %s6, %s4
  $region1: #{tpu_custom_call.1} parent=0
    #allocation5 [shape = 'u8[16384]{0}', space=vmem, size = 0x4000, scoped, tag = 'input window, operand 1, single buffered']
    #allocation6 [shape = 's32[1]{0}', space=sflag, size = 0x4, scoped, tag = 'scoped memory for tpu_custom_call.1']
    %8 = vsyncpa [#allocation6], 0
    // Predicated region
    $region2: #{tpu_custom_call.1} parent=1 // pred_check
      _
    $region3: #{tpu_custom_call.1} parent=1 // pred_check_branch
      %10 = sbr.rel (0) target = $region5
    $region4: #{tpu_custom_call.1} parent=1 // pred_region
      _
    $region5: #{tpu_custom_call.1} parent=1 // pred_fallthru
      _
    // Predicated region
    $region6: #{tpu_custom_call.1} parent=1 // pred_check
      _
    $region7: #{tpu_custom_call.1} parent=1 // pred_check_branch
      %12 = sbr.rel (0) target = $region9
    $region8: #{tpu_custom_call.1} parent=1 // pred_region
      %14 = vsyncadd [#allocation6], 0
      %s15 = sshll.u32 %s1, 4
      %s16 = int_to_ptr.hbm [resolvable:$true] %s15
      %s17 = sshll.u32 [#allocation5], 4
      %s18 = int_to_ptr.vmem [resolvable:$true] %s17
      %23 = dma.hbm_to_vmem [thread:$0]  %s16, 512, %s18, [#allocation6], 128, 128, 8
    $region9: #{tpu_custom_call.1} parent=1 // pred_fallthru
      _
    // Predicated region
    $region10: #{tpu_custom_call.1} parent=1 // pred_check
      _
    $region11: #{tpu_custom_call.1} parent=1 // pred_check_branch
      %25 = sbr.rel (0) target = $region13
    $region12: #{tpu_custom_call.1} parent=1 // pred_region
      _
    $region13: #{tpu_custom_call.1} parent=1 // pred_fallthru
      _
    // Predicated region
    $region14: #{tpu_custom_call.1} parent=1 // pred_check
      _
    $region15: #{tpu_custom_call.1} parent=1 // pred_check_branch
      %27 = sbr.rel (0) target = $region17
    $region16: #{tpu_custom_call.1} parent=1 // pred_region
      %29 = dma.done [#allocation6], 512
    $region17: #{tpu_custom_call.1} parent=1 // pred_fallthru
      _
    %p30 = scmp.eq.s32.totalorder 0, 0
    // Predicated region
    $region18: #{tpu_custom_call.1} parent=1 // pred_check
      %p31 = pneg %p30
    $region19: #{tpu_custom_call.1} parent=1 // pred_check_branch
      %33 = sbr.rel (%p31) target = $region21
    $region20: #{tpu_custom_call.1} parent=1 // pred_region
      %vm34 = vcmask 7168
      %35 = vst.msk [vmem:[#allocation2] sm:$0xff] %vm34, -1e+30
      %36 = vst.msk [vmem:[#allocation3] sm:$0xff] %vm34, 0.0
      %37 = vst.msk [vmem:[#allocation4] sm:$0xff] %vm34, 0.0
    $region21: #{tpu_custom_call.1} parent=1 // pred_fallthru
      _
    %v38 = vld [vmem:[%s0] sm:$0xff]
    %v39 = vld [vmem:[#allocation5] sm:$0xff]
    %v40 = vld [vmem:[#allocation5 + $0x8] sm:$0xff]
    %v41 = vld [vmem:[#allocation5 + $0x10] sm:$0xff]
    %v42 = vld [vmem:[#allocation5 + $0x18] sm:$0xff]
    %vm43 = vcmask 261120
    %v45 = vsel %vm43, %v38, 0
    %47 = vmatpush.msra.mxu0 0.0
    %48 = vmatpush.msra.mxu0 0.0
    %49 = vmatpush.msra.mxu0 0.0
    %50 = vmatpush.msra.mxu0 0.0
    %51 = vmatpush.msra.mxu0 0.0
    %52 = vmatpush.msra.mxu0 0.0
    %53 = vmatpush.msra.mxu0 0.0
    %54 = vmatpush.msra.mxu0 0.0
    %55 = vmatpush.msra.mxu0 0.0
    %56 = vmatpush.msra.mxu0 0.0
    %57 = vmatpush.msra.mxu0 0.0
    %58 = vmatpush.msra.mxu0 0.0
    %59 = vmatpush.msra.mxu0 %v42
    %60 = vmatpush.msra.mxu0 %v41
    %61 = vmatpush.msra.mxu0 %v40
    %62 = vmatpush.msra.mxu0 %v39
    %63 = vmatmul.f32.gmra.mxu0 %v45
    %v64 = vpop.f32.mrf.mxu0
    %v65 = vadd.f32 0.0, %v64
    %66 = vdwg.mxu0
    %v67 = vmul.f32 %v65, 2.0
    %v68 = vlaneseq
    %v69 = vand.u32 %v68, 127
    %s70 = smul.u32 0, 128
    %s71 = ssub.s32 16, %s70
    %v72 = vstv %s71
    %vm73 = vcmp.lt.s32.totalorder %v69, %v72
    %v74 = vsel %vm73, %v67, -1e+30
    %v75 = vld [vmem:[#allocation2] sm:$0xff]
    %76 = vmax.xlane.f32.xlu0 %v74
    %v77 = vpop.xlane.xlu0 %76
    %v78 = vmax.f32 %v75, %v77
    %80 = vset.pattern.permute.xlu0 0
    %81 = vperm.xlu0 %80, %v78
    %v82 = vpop.permute.xlu0 %81
    %v84 = vsub.f32 %v74, %v82
    %v85 = vmul.f32 %v84, 1.442695
    %v86 = vpow.pop %v85
    %v87 = vsub.f32 %v75, %v78
    %v88 = vmul.f32 %v87, 1.442695
    %v89 = vpow.pop %v88
    %v90 = vld [vmem:[#allocation3] sm:$0xff]
    %v91 = vmul.f32 %v89, %v90
    %92 = vadd.xlane.f32.xlu0 %v86
    %v93 = vpop.xlane.xlu0 %92
    %v94 = vadd.f32 %v91, %v93
    %vm95 = vcmask 7168
    %96 = vst.msk [vmem:[#allocation3] sm:$0xff] %vm95, %v94
    %97 = vst.msk [vmem:[#allocation2] sm:$0xff] %vm95, %v78
    %v98 = vld [vmem:[%s2] sm:$0xff]
    %v99 = vstv %s70
    %v100 = vsub.s32 %v98, %v99
    %101 = vset.pattern.permute.xlu0 0
    %102 = vperm.xlu0 %101, %v100
    %v103 = vpop.permute.xlu0 %102
    %vm104 = vcmp.eq.s32.totalorder %v69, %v103
    %v105 = vld [vmem:[#allocation4] sm:$0xff]
    %v106 = vsel %vm104, %v74, 0.0
    %107 = vadd.xlane.f32.xlu0 %v106
    %v108 = vpop.xlane.xlu0 %107
    %v109 = vadd.f32 %v105, %v108
    %110 = vst.msk [vmem:[#allocation4] sm:$0xff] %vm95, %v109
    // Predicated region
    $region22: #{tpu_custom_call.1} parent=1 // pred_check
      %p111 = pneg %p30
    $region23: #{tpu_custom_call.1} parent=1 // pred_check_branch
      %113 = sbr.rel (%p111) target = $region25
    $region24: #{tpu_custom_call.1} parent=1 // pred_region
      %v114 = vld [vmem:[#allocation4] sm:$0xff]
      %v115 = vld [vmem:[#allocation2] sm:$0xff]
      %v116 = vld [vmem:[#allocation3] sm:$0xff]
      %v117 = vlog2.pop %v116
      %v118 = vmul.f32 %v117, 0.6931472
      %v119 = vadd.f32 %v115, %v118
      %v120 = vsub.f32 %v114, %v119
      %121 = vst.msk [vmem:[%s3] sm:$0xff] %vm95, %v120
    $region25: #{tpu_custom_call.1} parent=1 // pred_fallthru
      _
    // Predicated region
    $region26: #{tpu_custom_call.1} parent=1 // pred_check
      _
    $region27: #{tpu_custom_call.1} parent=1 // pred_check_branch
      %123 = sbr.rel (0) target = $region29
    $region28: #{tpu_custom_call.1} parent=1 // pred_region
      _
    $region29: #{tpu_custom_call.1} parent=1 // pred_fallthru
      _
    // Predicated region
    $region30: #{tpu_custom_call.1} parent=1 // pred_check
      _
    $region31: #{tpu_custom_call.1} parent=1 // pred_check_branch
      %125 = sbr.rel (0) target = $region33
    $region32: #{tpu_custom_call.1} parent=1 // pred_region
      _
    $region33: #{tpu_custom_call.1} parent=1 // pred_fallthru
      _
    %126 = vsyncpa [#allocation6], 1

</llo_original>
